<compile_context>
chip_gen: v7x
topology: tpu7x:2x2x1
jax: 0.10.0
libtpu: 0.0.40
codegen_flags: <defaults>
</compile_context>

<pallas_src>
import jax
import jax.numpy as jnp
from jax.experimental import pallas as pl
from jax.experimental.pallas import tpu as pltpu


def _round_up(n, m):
    return ((n + m - 1) // m) * m


def mlp_kernel(x_ref, w1_ref, b1_ref, w2_ref, b2_ref, w3_ref, b3_ref, o_ref):
    # x_ref: (tile_b, 784) f32 straight from HBM. Cast to bf16 here — the VPU
    # has plenty of slack in this HBM-bound regime and it avoids a separate
    # wrapper-side pad/cast pass over x.
    x = x_ref[...].astype(jnp.bfloat16)
    h1 = jnp.dot(x, w1_ref[...], preferred_element_type=jnp.float32)
    h1 = jnp.maximum(h1 + b1_ref[...], 0.0)

    h2 = jnp.dot(h1.astype(jnp.bfloat16), w2_ref[...],
                 preferred_element_type=jnp.float32)
    h2 = jnp.maximum(h2 + b2_ref[...], 0.0)

    out = jnp.dot(h2.astype(jnp.bfloat16), w3_ref[...],
                  preferred_element_type=jnp.float32)
    out = out + b3_ref[...]

    # Lane-dense (tile_b, 128) bf16 store — no masked partial stores.
    o_ref[...] = out.astype(o_ref.dtype)


def prepare_params(params):
    """One-time weight/bias prep, hoisted out of the per-call forward path:
    cast weights to bf16 for the MXU feeds, keep biases f32, and zero-pad the
    classifier's output dim 10 -> 128 so the kernel's stores are lane-dense."""
    w3 = params["w3"]
    hid, ncls = w3.shape
    Np = _round_up(ncls, 128)
    w3p = jnp.zeros((hid, Np), jnp.bfloat16).at[:, :ncls].set(w3.astype(jnp.bfloat16))
    b3p = jnp.zeros((1, Np), jnp.float32).at[:, :ncls].set(
        params["b3"].reshape(1, -1).astype(jnp.float32))
    return dict(
        w1=params["w1"].astype(jnp.bfloat16),
        b1=params["b1"].reshape(1, -1).astype(jnp.float32),
        w2=params["w2"].astype(jnp.bfloat16),
        b2=params["b2"].reshape(1, -1).astype(jnp.float32),
        w3=w3p, b3=b3p)


def _choose_tile_b(B, tile_b_max, min_steps=2):
    """Balanced batch tiling: tiles are multiples of 16, whole-tile padding
    waste is bounded, and (for B > 16) there are >= min_steps grid steps so the
    'parallel' batch axis shards across both v7x TensorCores."""
    if B <= 16:
        n_tiles = 1
    else:
        n_tiles = max(-(-B // tile_b_max), min_steps)
    tile_b = _round_up(-(-B // n_tiles), 16)
    Bp = _round_up(B, tile_b)
    return tile_b, Bp


def simple_model_forward(x, prepped, *, num_classes=10, tile_b_max=1024):
    """x: (B, input_size) float32.  prepped: output of prepare_params()."""
    B, in_size = x.shape
    w1, b1 = prepped["w1"], prepped["b1"]
    w2, b2 = prepped["w2"], prepped["b2"]
    w3, b3 = prepped["w3"], prepped["b3"]
    hid = w1.shape[1]
    Np = w3.shape[1]          # padded class dim (128)

    tile_b, Bp = _choose_tile_b(B, tile_b_max)

    # Only the (rare) ragged-batch case pays a pad copy; feature dim is never
    # padded or pre-cast. Padded rows produce garbage logits that are sliced off.
    if Bp != B:
        x_in = jnp.zeros((Bp, in_size), x.dtype).at[:B].set(x)
    else:
        x_in = x

    grid = (Bp // tile_b,)

    # Weights/biases are small and grid-invariant: every step sees the full
    # arrays (block shape == full array shape satisfies the (8,128) rule).
    full = lambda a: pl.BlockSpec(a.shape, lambda i: (0, 0))

    flops = 2 * Bp * (in_size * hid + hid * hid + hid * Np)
    bytes_accessed = (
        Bp * in_size * 4            # f32 x read
        + Bp * Np * 2               # bf16 logits write
        + (w1.size + w2.size + w3.size) * 2
        + (b1.size + b2.size + b3.size) * 4)

    out_padded = pl.pallas_call(
        mlp_kernel,
        out_shape=jax.ShapeDtypeStruct((Bp, Np), jnp.bfloat16),
        grid_spec=pltpu.PrefetchScalarGridSpec(
            num_scalar_prefetch=0,
            grid=grid,
            in_specs=[
                # Streamed x tile: full-K block (784 == array dim, so the
                # (8,128) rule is satisfied without padding K).
                pl.BlockSpec((tile_b, in_size), lambda i: (i, 0)),
                full(w1), full(b1),
                full(w2), full(b2),
                full(w3), full(b3),
            ],
            out_specs=pl.BlockSpec((tile_b, Np), lambda i: (i, 0)),
        ),
        compiler_params=pltpu.CompilerParams(
            dimension_semantics=("parallel",),
            vmem_limit_bytes=32 * 1024 * 1024,
        ),
        cost_estimate=pl.CostEstimate(
            flops=flops, transcendentals=0, bytes_accessed=bytes_accessed),
    )(x_in, w1, b1, w2, b2, w3, b3)

    # Strip batch / class padding; return f32 logits like the PyTorch module.
    return out_padded[:B, :num_classes].astype(jnp.float32)


def init_params(key, input_size=784, hidden_size=128, num_classes=10):
    """nn.Linear-style init; weights stored pre-transposed as (in, out)."""
    ks = jax.random.split(key, 6)

    def linear(kw, kb, fan_in, fan_out):
        # PyTorch default init: U(-1/sqrt(fan_in), 1/sqrt(fan_in))
        bound = 1.0 / jnp.sqrt(jnp.float32(fan_in))
        w = jax.random.uniform(kw, (fan_in, fan_out), jnp.float32, -bound, bound)
        b = jax.random.uniform(kb, (1, fan_out), jnp.float32, -bound, bound)
        return w, b

    w1, b1 = linear(ks[0], ks[1], input_size, hidden_size)
    w2, b2 = linear(ks[2], ks[3], hidden_size, hidden_size)
    w3, b3 = linear(ks[4], ks[5], hidden_size, num_classes)
    return dict(w1=w1, b1=b1, w2=w2, b2=b2, w3=w3, b3=b3)


if __name__ == "__main__":
    key = jax.random.PRNGKey(0)
    k_x, k_p = jax.random.split(key)

    B, IN, HID, NCLS = 64, 784, 128, 10
    x = jax.random.normal(k_x, (B, IN), dtype=jnp.float32)
    params = init_params(k_p, IN, HID, NCLS)

    # Hoisted out of the forward path: done once per model.
    prepped = prepare_params(params)

    out = simple_model_forward(x, prepped, num_classes=NCLS)
    out = jax.block_until_ready(out)

    # Reference with the same bf16 input/weight rounding (f32 accumulate),
    # matching the kernel's numerics.
    def ref(x, p):
        r = lambda a: a.astype(jnp.bfloat16).astype(jnp.float32)
        h = jnp.maximum(r(x) @ r(p["w1"]) + p["b1"], 0.0)
        h = jnp.maximum(r(h) @ r(p["w2"]) + p["b2"], 0.0)
        return r(h) @ r(p["w3"]) + p["b3"]

    expected = ref(x, params)
    assert out.shape == (B, NCLS)
    assert jnp.allclose(out, expected, atol=2e-2, rtol=2e-2), (
        float(jnp.max(jnp.abs(out - expected))))

    print("KERNEL_OK")
</pallas_src>

<mosaic_0001>
module attributes {stable_mosaic.version = 11 : i64} {
  func.func @mlp_kernel(%arg0: i32, %arg1: memref<32x784xf32, #tpu.memory_space<vmem>>, %arg2: memref<784x128xbf16, #tpu.memory_space<vmem>>, %arg3: memref<1x128xf32, #tpu.memory_space<vmem>>, %arg4: memref<128x128xbf16, #tpu.memory_space<vmem>>, %arg5: memref<1x128xf32, #tpu.memory_space<vmem>>, %arg6: memref<128x128xbf16, #tpu.memory_space<vmem>>, %arg7: memref<1x128xf32, #tpu.memory_space<vmem>>, %arg8: memref<32x128xbf16, #tpu.memory_space<vmem>>) attributes {dimension_semantics = [#tpu.dimension_semantics<parallel>], iteration_bounds = array<i64: 2>, scalar_prefetch = 0 : i64, scratch_operands = 0 : i64, tpu.core_type = #tpu.core_type<tc>, window_params = [{transform_indices = @transform_0, window_bounds = array<i64: 32, 784>}, {pipeline_mode = #tpu.pipeline_mode<synchronous>, transform_indices = @transform_1, window_bounds = array<i64: 784, 128>}, {pipeline_mode = #tpu.pipeline_mode<synchronous>, transform_indices = @transform_2, window_bounds = array<i64: 1, 128>}, {pipeline_mode = #tpu.pipeline_mode<synchronous>, transform_indices = @transform_3, window_bounds = array<i64: 128, 128>}, {pipeline_mode = #tpu.pipeline_mode<synchronous>, transform_indices = @transform_4, window_bounds = array<i64: 1, 128>}, {pipeline_mode = #tpu.pipeline_mode<synchronous>, transform_indices = @transform_5, window_bounds = array<i64: 128, 128>}, {pipeline_mode = #tpu.pipeline_mode<synchronous>, transform_indices = @transform_6, window_bounds = array<i64: 1, 128>}, {transform_indices = @transform_7, window_bounds = array<i64: 32, 128>}]} {
    %c0 = arith.constant 0 : index
    %c0_0 = arith.constant 0 : index
    %0 = vector.load %arg1[%c0, %c0_0] : memref<32x784xf32, #tpu.memory_space<vmem>>, vector<32x784xf32>
    %1 = arith.truncf %0 : vector<32x784xf32> to vector<32x784xbf16>
    %c0_1 = arith.constant 0 : index
    %c0_2 = arith.constant 0 : index
    %2 = vector.load %arg2[%c0_1, %c0_2] : memref<784x128xbf16, #tpu.memory_space<vmem>>, vector<784x128xbf16>
    %cst = arith.constant dense<0.000000e+00> : vector<32x128xf32>
    %3 = tpu.matmul %1, %2, %cst {dimension_numbers = #tpu.dot_dimension_numbers<[1], [0], [0], [1], [0, 0, 1, 1], [], []>} : vector<32x784xbf16>, vector<784x128xbf16>, vector<32x128xf32> -> vector<32x128xf32>
    %c0_3 = arith.constant 0 : index
    %c0_4 = arith.constant 0 : index
    %4 = vector.load %arg3[%c0_3, %c0_4] : memref<1x128xf32, #tpu.memory_space<vmem>>, vector<1x128xf32>
    %5 = vector.broadcast %4 : vector<1x128xf32> to vector<32x128xf32>
    %6 = arith.addf %3, %5 : vector<32x128xf32>
    %cst_5 = arith.constant 0.000000e+00 : f32
    %7 = vector.broadcast %cst_5 : f32 to vector<32x128xf32>
    %8 = arith.maximumf %6, %7 : vector<32x128xf32>
    %9 = arith.truncf %8 : vector<32x128xf32> to vector<32x128xbf16>
    %c0_6 = arith.constant 0 : index
    %c0_7 = arith.constant 0 : index
    %10 = vector.load %arg4[%c0_6, %c0_7] : memref<128x128xbf16, #tpu.memory_space<vmem>>, vector<128x128xbf16>
    %cst_8 = arith.constant dense<0.000000e+00> : vector<32x128xf32>
    %11 = tpu.matmul %9, %10, %cst_8 {dimension_numbers = #tpu.dot_dimension_numbers<[1], [0], [0], [1], [0, 0, 1, 1], [], []>} : vector<32x128xbf16>, vector<128x128xbf16>, vector<32x128xf32> -> vector<32x128xf32>
    %c0_9 = arith.constant 0 : index
    %c0_10 = arith.constant 0 : index
    %12 = vector.load %arg5[%c0_9, %c0_10] : memref<1x128xf32, #tpu.memory_space<vmem>>, vector<1x128xf32>
    %13 = vector.broadcast %12 : vector<1x128xf32> to vector<32x128xf32>
    %14 = arith.addf %11, %13 : vector<32x128xf32>
    %cst_11 = arith.constant 0.000000e+00 : f32
    %15 = vector.broadcast %cst_11 : f32 to vector<32x128xf32>
    %16 = arith.maximumf %14, %15 : vector<32x128xf32>
    %17 = arith.truncf %16 : vector<32x128xf32> to vector<32x128xbf16>
    %c0_12 = arith.constant 0 : index
    %c0_13 = arith.constant 0 : index
    %18 = vector.load %arg6[%c0_12, %c0_13] : memref<128x128xbf16, #tpu.memory_space<vmem>>, vector<128x128xbf16>
    %cst_14 = arith.constant dense<0.000000e+00> : vector<32x128xf32>
    %19 = tpu.matmul %17, %18, %cst_14 {dimension_numbers = #tpu.dot_dimension_numbers<[1], [0], [0], [1], [0, 0, 1, 1], [], []>} : vector<32x128xbf16>, vector<128x128xbf16>, vector<32x128xf32> -> vector<32x128xf32>
    %c0_15 = arith.constant 0 : index
    %c0_16 = arith.constant 0 : index
    %20 = vector.load %arg7[%c0_15, %c0_16] : memref<1x128xf32, #tpu.memory_space<vmem>>, vector<1x128xf32>
    %21 = vector.broadcast %20 : vector<1x128xf32> to vector<32x128xf32>
    %22 = arith.addf %19, %21 : vector<32x128xf32>
    %23 = arith.truncf %22 : vector<32x128xf32> to vector<32x128xbf16>
    %c0_17 = arith.constant 0 : index
    %c0_18 = arith.constant 0 : index
    %24 = vector.load %arg8[%c0_17, %c0_18] : memref<32x128xbf16, #tpu.memory_space<vmem>>, vector<32x128xbf16>
    tpu.vector_store %arg8[%c0_17, %c0_18], %23 {strides = array<i32>} : memref<32x128xbf16, #tpu.memory_space<vmem>>, vector<32x128xbf16>,
    return
  }
  func.func @transform_0(%arg0: i32) -> (i32, i32) {
    %c0_i32 = arith.constant 0 : i32
    %c0_i32_0 = arith.constant 0 : i32
    return %arg0, %c0_i32 : i32, i32
  }
  func.func @transform_1(%arg0: i32) -> (i32, i32) {
    %c0_i32 = arith.constant 0 : i32
    %c0_i32_0 = arith.constant 0 : i32
    %c0_i32_1 = arith.constant 0 : i32
    return %c0_i32, %c0_i32_0 : i32, i32
  }
  func.func @transform_2(%arg0: i32) -> (i32, i32) {
    %c0_i32 = arith.constant 0 : i32
    %c0_i32_0 = arith.constant 0 : i32
    %c0_i32_1 = arith.constant 0 : i32
    return %c0_i32, %c0_i32_0 : i32, i32
  }
  func.func @transform_3(%arg0: i32) -> (i32, i32) {
    %c0_i32 = arith.constant 0 : i32
    %c0_i32_0 = arith.constant 0 : i32
    %c0_i32_1 = arith.constant 0 : i32
    return %c0_i32, %c0_i32_0 : i32, i32
  }
  func.func @transform_4(%arg0: i32) -> (i32, i32) {
    %c0_i32 = arith.constant 0 : i32
    %c0_i32_0 = arith.constant 0 : i32
    %c0_i32_1 = arith.constant 0 : i32
    return %c0_i32, %c0_i32_0 : i32, i32
  }
  func.func @transform_5(%arg0: i32) -> (i32, i32) {
    %c0_i32 = arith.constant 0 : i32
    %c0_i32_0 = arith.constant 0 : i32
    %c0_i32_1 = arith.constant 0 : i32
    return %c0_i32, %c0_i32_0 : i32, i32
  }
  func.func @transform_6(%arg0: i32) -> (i32, i32) {
    %c0_i32 = arith.constant 0 : i32
    %c0_i32_0 = arith.constant 0 : i32
    %c0_i32_1 = arith.constant 0 : i32
    return %c0_i32, %c0_i32_0 : i32, i32
  }
  func.func @transform_7(%arg0: i32) -> (i32, i32) {
    %c0_i32 = arith.constant 0 : i32
    %c0_i32_0 = arith.constant 0 : i32
    return %arg0, %c0_i32 : i32, i32
  }
}

</mosaic_0001>

<llo_original>
// kernel: tpu_custom_call.1
$region0: #{tpu_custom_call.1}
  #allocation0 [shape = 'u32[]', space=smem, size = 0x4, offset = 0x4, fixed_abs, tag = 'smem constant byte address 0x4 - core index']
  #allocation1 [shape = 'u32[144,128]{1,0:T(1,128)}', space=vmem, size = 0x12000, scoped, tag = 'internal scratch']
  %s0 = inlined_call_operand.hbm [shape: f32[64,784], index: 0, kind: input, shape index: {}]
  %s1 = inlined_call_operand.hbm [shape: bf16[784,128], index: 1, kind: input, shape index: {}]
  %s2 = inlined_call_operand.vmem [shape: f32[1,128], index: 2, kind: input, shape index: {}]
  %s3 = inlined_call_operand.hbm [shape: bf16[128,128], index: 3, kind: input, shape index: {}]
  %s4 = inlined_call_operand.vmem [shape: f32[1,128], index: 4, kind: input, shape index: {}]
  %s5 = inlined_call_operand.hbm [shape: bf16[128,128], index: 5, kind: input, shape index: {}]
  %s6 = inlined_call_operand.vmem [shape: f32[1,128], index: 6, kind: input, shape index: {}]
  %s7 = inlined_call_operand.hbm [shape: bf16[64,128], index: 7, kind: output, shape index: {}]
  %s8 = sld [smem:[#allocation0]]
  $region77: #{tpu_custom_call.1} parent=0
    _
  %s10 = ssub.s32 1, %s8
  %s11 = scalar_select 0, %s10, %s8
  $region1: #{tpu_custom_call.1} parent=0
    #allocation2 [shape = 'u8[229376]{0}', space=vmem, size = 0x38000, scoped, tag = 'input window, operand 0']
    #allocation3 [shape = 's32[2]{0}', space=sflag, size = 0x8, scoped, tag = 'scoped memory for tpu_custom_call.1']
    #allocation4 [shape = 's32[2]{0}', space=sflag, size = 0x8, scoped, tag = 'scoped memory for tpu_custom_call.1']
    #allocation5 [shape = 'u8[200704]{0}', space=vmem, size = 0x31000, scoped, tag = 'input window, operand 1, single buffered']
    #allocation6 [shape = 's32[1]{0}', space=sflag, size = 0x4, scoped, tag = 'scoped memory for tpu_custom_call.1']
    #allocation7 [shape = 'u8[32768]{0}', space=vmem, size = 0x8000, scoped, tag = 'input window, operand 3, single buffered']
    #allocation8 [shape = 'u8[32768]{0}', space=vmem, size = 0x8000, scoped, tag = 'input window, operand 5, single buffered']
    #allocation9 [shape = 's32[1]{0}', space=sflag, size = 0x4, scoped, tag = 'scoped memory for tpu_custom_call.1']
    #allocation10 [shape = 'u8[16384]{0}', space=vmem, size = 0x4000, scoped, tag = 'output window, operand 0']
    %12 = vsyncpa [#allocation3], 0
    %s13 = scalar_lea.sflag [#allocation3], 1
    %14 = vsyncpa %s13, 0
    %15 = vsyncpa [#allocation6], 0
    %16 = vsyncpa [#allocation9], 0
    %17 = vsyncpa [#allocation4], 0
    %s18 = scalar_lea.sflag [#allocation4], 1
    %19 = vsyncpa %s18, 0
    loop: start=0, step=1, limit=4
    $region2: #{tpu_custom_call.1} parent=1 // loop_pre_header
      _
    $region3: #{tpu_custom_call.1} parent=1 // loop_header
      %s21 = sphi 0, %s25
      %p22 = scmp.ge.s32.totalorder %s21, 4
      %s31 = sphi 0, %s33
      %s34 = sphi 0, %s31
      %s35 = sphi 0, %s34
      %s51 = sphi 0, %s35
      %s55 = sphi 0, %s55
      %s57 = sphi 0, %s55
      %s58 = sphi 0, %s57
      %s72 = sphi 0, %s58
      %s76 = sphi 0, %s76
      %s78 = sphi 0, %s76
      %s79 = sphi 0, %s78
      %s93 = sphi 0, %s79
      %s97 = sphi 0, %s97
      %s99 = sphi 0, %s97
      %s100 = sphi 0, %s99
      %s114 = sphi 0, %s100
      %s118 = sphi 0, %s118
      %s120 = sphi 0, %s118
      %s121 = sphi 0, %s120
      %s135 = sphi 0, %s121
      %s139 = sphi 0, %s139
      %s141 = sphi 0, %s139
      %s142 = sphi 0, %s141
      %s156 = sphi 0, %s142
      %s160 = sphi 0, %s160
      %s162 = sphi 0, %s160
      %s163 = sphi 0, %s162
      %s177 = sphi 0, %s163
      %s183 = sphi 0, %s185
      %s186 = sphi 0, %s183
      %s187 = sphi 0, %s186
      %s203 = sphi 0, %s187
    $region4: #{tpu_custom_call.1} parent=1 // loop_header_branch
      %24 = sbr.rel (%p22) target = $region8
    $region5: #{tpu_custom_call.1} parent=1 // loop_body
      %s26 = ssub.s32 %s21, 1
      %s27 = ssub.s32 %s21, 2
      %s28 = sadd.s32 %s21, 1
      %s29 = ssub.s32 %s21, %s28
      %p30 = scmp.eq.s32.totalorder %s29, 0
      %s32 = sadd.s32 %s31, 1
      %s33 = scalar_select %p30, %s31, %s32
      %p36 = pneg %p30
      %p37 = scmp.eq.s32.totalorder %s21, 1
      %p38 = por %p36, %p37
      %p39 = scmp.ne.s32.totalorder %s31, %s34
      %p40 = scmp.eq.s32.totalorder %s21, 0
      %p41 = por %p39, %p40
      %p42 = scmp.ne.s32.totalorder %s31, %s34
      %p43 = scmp.eq.s32.totalorder %s26, 1
      %p44 = por %p42, %p43
      %p45 = scmp.ne.s32.totalorder %s34, %s35
      %p46 = scmp.eq.s32.totalorder %s26, 0
      %p47 = por %p45, %p46
      %p48 = scmp.ne.s32.totalorder %s34, %s35
      %p49 = scmp.eq.s32.totalorder %s27, 1
      %p50 = por %p48, %p49
      %p52 = scmp.ne.s32.totalorder %s35, %s51
      %p53 = scmp.eq.s32.totalorder %s27, 0
      %p54 = por %p52, %p53
      %s56 = sadd.s32 %s55, 1
      %p59 = scmp.eq.s32.totalorder %s21, 1
      %p60 = scmp.ne.s32.totalorder %s55, %s57
      %p61 = scmp.eq.s32.totalorder %s21, 0
      %p62 = por %p60, %p61
      %p63 = scmp.ne.s32.totalorder %s55, %s57
      %p64 = scmp.eq.s32.totalorder %s26, 1
      %p65 = por %p63, %p64
      %p66 = scmp.ne.s32.totalorder %s57, %s58
      %p67 = scmp.eq.s32.totalorder %s26, 0
      %p68 = por %p66, %p67
      %p69 = scmp.ne.s32.totalorder %s57, %s58
      %p70 = scmp.eq.s32.totalorder %s27, 1
      %p71 = por %p69, %p70
      %p73 = scmp.ne.s32.totalorder %s58, %s72
      %p74 = scmp.eq.s32.totalorder %s27, 0
      %p75 = por %p73, %p74
      %s77 = sadd.s32 %s76, 1
      %p80 = scmp.eq.s32.totalorder %s21, 1
      %p81 = scmp.ne.s32.totalorder %s76, %s78
      %p82 = scmp.eq.s32.totalorder %s21, 0
      %p83 = por %p81, %p82
      %p84 = scmp.ne.s32.totalorder %s76, %s78
      %p85 = scmp.eq.s32.totalorder %s26, 1
      %p86 = por %p84, %p85
      %p87 = scmp.ne.s32.totalorder %s78, %s79
      %p88 = scmp.eq.s32.totalorder %s26, 0
      %p89 = por %p87, %p88
      %p90 = scmp.ne.s32.totalorder %s78, %s79
      %p91 = scmp.eq.s32.totalorder %s27, 1
      %p92 = por %p90, %p91
      %p94 = scmp.ne.s32.totalorder %s79, %s93
      %p95 = scmp.eq.s32.totalorder %s27, 0
      %p96 = por %p94, %p95
      %s98 = sadd.s32 %s97, 1
      %p101 = scmp.eq.s32.totalorder %s21, 1
      %p102 = scmp.ne.s32.totalorder %s97, %s99
      %p103 = scmp.eq.s32.totalorder %s21, 0
      %p104 = por %p102, %p103
      %p105 = scmp.ne.s32.totalorder %s97, %s99
      %p106 = scmp.eq.s32.totalorder %s26, 1
      %p107 = por %p105, %p106
      %p108 = scmp.ne.s32.totalorder %s99, %s100
      %p109 = scmp.eq.s32.totalorder %s26, 0
      %p110 = por %p108, %p109
      %p111 = scmp.ne.s32.totalorder %s99, %s100
      %p112 = scmp.eq.s32.totalorder %s27, 1
      %p113 = por %p111, %p112
      %p115 = scmp.ne.s32.totalorder %s100, %s114
      %p116 = scmp.eq.s32.totalorder %s27, 0
      %p117 = por %p115, %p116
      %s119 = sadd.s32 %s118, 1
      %p122 = scmp.eq.s32.totalorder %s21, 1
      %p123 = scmp.ne.s32.totalorder %s118, %s120
      %p124 = scmp.eq.s32.totalorder %s21, 0
      %p125 = por %p123, %p124
      %p126 = scmp.ne.s32.totalorder %s118, %s120
      %p127 = scmp.eq.s32.totalorder %s26, 1
      %p128 = por %p126, %p127
      %p129 = scmp.ne.s32.totalorder %s120, %s121
      %p130 = scmp.eq.s32.totalorder %s26, 0
      %p131 = por %p129, %p130
      %p132 = scmp.ne.s32.totalorder %s120, %s121
      %p133 = scmp.eq.s32.totalorder %s27, 1
      %p134 = por %p132, %p133
      %p136 = scmp.ne.s32.totalorder %s121, %s135
      %p137 = scmp.eq.s32.totalorder %s27, 0
      %p138 = por %p136, %p137
      %s140 = sadd.s32 %s139, 1
      %p143 = scmp.eq.s32.totalorder %s21, 1
      %p144 = scmp.ne.s32.totalorder %s139, %s141
      %p145 = scmp.eq.s32.totalorder %s21, 0
      %p146 = por %p144, %p145
      %p147 = scmp.ne.s32.totalorder %s139, %s141
      %p148 = scmp.eq.s32.totalorder %s26, 1
      %p149 = por %p147, %p148
      %p150 = scmp.ne.s32.totalorder %s141, %s142
      %p151 = scmp.eq.s32.totalorder %s26, 0
      %p152 = por %p150, %p151
      %p153 = scmp.ne.s32.totalorder %s141, %s142
      %p154 = scmp.eq.s32.totalorder %s27, 1
      %p155 = por %p153, %p154
      %p157 = scmp.ne.s32.totalorder %s142, %s156
      %p158 = scmp.eq.s32.totalorder %s27, 0
      %p159 = por %p157, %p158
      %s161 = sadd.s32 %s160, 1
      %p164 = scmp.eq.s32.totalorder %s21, 1
      %p165 = scmp.ne.s32.totalorder %s160, %s162
      %p166 = scmp.eq.s32.totalorder %s21, 0
      %p167 = por %p165, %p166
      %p168 = scmp.ne.s32.totalorder %s160, %s162
      %p169 = scmp.eq.s32.totalorder %s26, 1
      %p170 = por %p168, %p169
      %p171 = scmp.ne.s32.totalorder %s162, %s163
      %p172 = scmp.eq.s32.totalorder %s26, 0
      %p173 = por %p171, %p172
      %p174 = scmp.ne.s32.totalorder %s162, %s163
      %p175 = scmp.eq.s32.totalorder %s27, 1
      %p176 = por %p174, %p175
      %p178 = scmp.ne.s32.totalorder %s163, %s177
      %p179 = scmp.eq.s32.totalorder %s27, 0
      %p180 = por %p178, %p179
      %s181 = ssub.s32 %s21, %s28
      %p182 = scmp.eq.s32.totalorder %s181, 0
      %s184 = sadd.s32 %s183, 1
      %s185 = scalar_select %p182, %s183, %s184
      %p188 = pneg %p182
      %p189 = scmp.eq.s32.totalorder %s21, 1
      %p190 = por %p188, %p189
      %p191 = scmp.ne.s32.totalorder %s183, %s186
      %p192 = scmp.eq.s32.totalorder %s21, 0
      %p193 = por %p191, %p192
      %p194 = scmp.ne.s32.totalorder %s183, %s186
      %p195 = scmp.eq.s32.totalorder %s26, 1
      %p196 = por %p194, %p195
      %p197 = scmp.ne.s32.totalorder %s186, %s187
      %p198 = scmp.eq.s32.totalorder %s26, 0
      %p199 = por %p197, %p198
      %p200 = scmp.ne.s32.totalorder %s186, %s187
      %p201 = scmp.eq.s32.totalorder %s27, 1
      %p202 = por %p200, %p201
      %p204 = scmp.ne.s32.totalorder %s187, %s203
      %p205 = scmp.eq.s32.totalorder %s27, 0
      %p206 = por %p204, %p205
      %p207 = scmp.le.s32.totalorder 1, %s21
      %p208 = scmp.lt.s32.totalorder %s21, 3
      %p209 = pnand %p207, %p208
      %p210 = pneg %p209
      // Predicated region
      $region9: #{tpu_custom_call.1} parent=5 // pred_check
        _
      $region10: #{tpu_custom_call.1} parent=5 // pred_check_branch
        %212 = sbr.rel (%p209) target = $region12
      $region11: #{tpu_custom_call.1} parent=5 // pred_region
        %s213 = ssub.s32 %s21, 1
        // Predicated region
        $region13: #{tpu_custom_call.1} parent=11 // pred_check
          %p214 = pneg %p68
        $region14: #{tpu_custom_call.1} parent=11 // pred_check_branch
          %216 = sbr.rel (%p214) target = $region16
        $region15: #{tpu_custom_call.1} parent=11 // pred_region
          %s218 = ssub.s32 6272, 6272
          %219 = vsyncadd [#allocation6], %s218
          %s220 = sshll.u32 [#allocation5], 4
          %s221 = int_to_ptr.vmem [resolvable:$true] %s220
          %226 = dma.hbm_to_vmem [thread:$0]  %s1, 6272, %s221, [#allocation6], 64, 64, 4
        $region16: #{tpu_custom_call.1} parent=11 // pred_fallthru
          _
        // Predicated region
        $region17: #{tpu_custom_call.1} parent=11 // pred_check
          %p227 = pneg %p89
        $region18: #{tpu_custom_call.1} parent=11 // pred_check_branch
          %229 = sbr.rel (%p227) target = $region20
        $region19: #{tpu_custom_call.1} parent=11 // pred_region
          _
        $region20: #{tpu_custom_call.1} parent=11 // pred_fallthru
          _
        // Predicated region
        $region21: #{tpu_custom_call.1} parent=11 // pred_check
          %p230 = pneg %p110
        $region22: #{tpu_custom_call.1} parent=11 // pred_check_branch
          %232 = sbr.rel (%p230) target = $region24
        $region23: #{tpu_custom_call.1} parent=11 // pred_region
          %s234 = ssub.s32 1024, 1024
          %235 = vsyncadd [#allocation6], %s234
          %s236 = sshll.u32 [#allocation7], 4
          %s237 = int_to_ptr.vmem [resolvable:$true] %s236
          %242 = dma.hbm_to_vmem [thread:$0]  %s3, 1024, %s237, [#allocation6], 64, 64, 4
        $region24: #{tpu_custom_call.1} parent=11 // pred_fallthru
          _
        // Predicated region
        $region25: #{tpu_custom_call.1} parent=11 // pred_check
          %p243 = pneg %p131
        $region26: #{tpu_custom_call.1} parent=11 // pred_check_branch
          %245 = sbr.rel (%p243) target = $region28
        $region27: #{tpu_custom_call.1} parent=11 // pred_region
          _
        $region28: #{tpu_custom_call.1} parent=11 // pred_fallthru
          _
        // Predicated region
        $region29: #{tpu_custom_call.1} parent=11 // pred_check
          %p246 = pneg %p152
        $region30: #{tpu_custom_call.1} parent=11 // pred_check_branch
          %248 = sbr.rel (%p246) target = $region32
        $region31: #{tpu_custom_call.1} parent=11 // pred_region
          %s250 = ssub.s32 1024, 1024
          %251 = vsyncadd [#allocation9], %s250
          %s252 = sshll.u32 [#allocation8], 4
          %s253 = int_to_ptr.vmem [resolvable:$true] %s252
          %258 = dma.hbm_to_vmem [thread:$0]  %s5, 1024, %s253, [#allocation9], 64, 64, 4
        $region32: #{tpu_custom_call.1} parent=11 // pred_fallthru
          _
        // Predicated region
        $region33: #{tpu_custom_call.1} parent=11 // pred_check
          %p259 = pneg %p173
        $region34: #{tpu_custom_call.1} parent=11 // pred_check_branch
          %261 = sbr.rel (%p259) target = $region36
        $region35: #{tpu_custom_call.1} parent=11 // pred_region
          _
        $region36: #{tpu_custom_call.1} parent=11 // pred_fallthru
          _
      $region12: #{tpu_custom_call.1} parent=5 // pred_fallthru
        _
      %p262 = scmp.lt.s32.totalorder %s21, 2
      // Predicated region
      $region37: #{tpu_custom_call.1} parent=5 // pred_check
        %p263 = pneg %p262
      $region38: #{tpu_custom_call.1} parent=5 // pred_check_branch
        %265 = sbr.rel (%p263) target = $region40
      $region39: #{tpu_custom_call.1} parent=5 // pred_region
        // Predicated region
        $region41: #{tpu_custom_call.1} parent=39 // pred_check
          %p266 = pneg %p41
        $region42: #{tpu_custom_call.1} parent=39 // pred_check_branch
          %268 = sbr.rel (%p266) target = $region44
        $region43: #{tpu_custom_call.1} parent=39 // pred_region
          %s269 = sand.u32 %s31, 1
          %s270 = scalar_lea.sflag [#allocation3], %s269
          %s271 = sand.u32 %s31, 1
          %s272 = smul.addr %s271, 224
          %s273 = scalar_lea.vmem [#allocation2], %s272
          %s274 = smul.u32 4, %s21
          %s276 = ssub.s32 3584, 3584
          %277 = vsyncadd %s270, %s276
          %s278 = smul.addr %s274, 7
          %s279 = smul.addr %s278, 128
          %s280 = scalar_lea.hbm %s0, %s279
          %s281 = sshll.u32 %s273, 4
          %s282 = int_to_ptr.vmem [resolvable:$true] %s281
          %287 = dma.hbm_to_vmem [thread:$0]  %s280, 3584, %s282, %s270, 896, 896, 56
        $region44: #{tpu_custom_call.1} parent=39 // pred_fallthru
          _
      $region40: #{tpu_custom_call.1} parent=5 // pred_fallthru
        _
      %p288 = scmp.le.s32.totalorder 1, %s21
      %p289 = scmp.lt.s32.totalorder %s21, 3
      %p290 = pnand %p288, %p289
      %p291 = pneg %p290
      // Predicated region
      $region45: #{tpu_custom_call.1} parent=5 // pred_check
        _
      $region46: #{tpu_custom_call.1} parent=5 // pred_check_branch
        %293 = sbr.rel (%p290) target = $region48
      $region47: #{tpu_custom_call.1} parent=5 // pred_region
        %s294 = ssub.s32 %s21, 1
        %s295 = sand.u32 %s34, 1
        %s296 = scalar_lea.sflag [#allocation3], %s295
        %s297 = sand.u32 %s34, 1
        %s298 = smul.addr %s297, 224
        %s299 = scalar_lea.vmem [#allocation2], %s298
        // Predicated region
        $region49: #{tpu_custom_call.1} parent=47 // pred_check
          %p300 = pneg %p47
        $region50: #{tpu_custom_call.1} parent=47 // pred_check_branch
          %302 = sbr.rel (%p300) target = $region52
        $region51: #{tpu_custom_call.1} parent=47 // pred_region
          %303 = dma.done %s296, 3584
        $region52: #{tpu_custom_call.1} parent=47 // pred_fallthru
          _
        // Predicated region
        $region53: #{tpu_custom_call.1} parent=47 // pred_check
          %p304 = pneg %p68
        $region54: #{tpu_custom_call.1} parent=47 // pred_check_branch
          %306 = sbr.rel (%p304) target = $region56
        $region55: #{tpu_custom_call.1} parent=47 // pred_region
          %307 = dma.done [#allocation6], 6272
        $region56: #{tpu_custom_call.1} parent=47 // pred_fallthru
          _
        // Predicated region
        $region57: #{tpu_custom_call.1} parent=47 // pred_check
          %p308 = pneg %p110
        $region58: #{tpu_custom_call.1} parent=47 // pred_check_branch
          %310 = sbr.rel (%p308) target = $region60
        $region59: #{tpu_custom_call.1} parent=47 // pred_region
          %311 = dma.done [#allocation6], 1024
        $region60: #{tpu_custom_call.1} parent=47 // pred_fallthru
          _
        // Predicated region
        $region61: #{tpu_custom_call.1} parent=47 // pred_check
          %p312 = pneg %p152
        $region62: #{tpu_custom_call.1} parent=47 // pred_check_branch
          %314 = sbr.rel (%p312) target = $region64
        $region63: #{tpu_custom_call.1} parent=47 // pred_region
          %315 = dma.done [#allocation9], 1024
        $region64: #{tpu_custom_call.1} parent=47 // pred_fallthru
          _
        %s316 = sand.u32 %s34, 1
        %s317 = scalar_lea.sflag [#allocation3], %s316
        %s318 = sand.u32 %s34, 1
        %s319 = smul.addr %s318, 224
        %s320 = scalar_lea.vmem [#allocation2], %s319
        %p321 = pneg %p47
        %p322 = pneg %p44
        %p323 = pneg %p68
        %p324 = pneg %p65
        %p325 = pneg %p89
        %p326 = pneg %p86
        %p327 = pneg %p110
        %p328 = pneg %p107
        %p329 = pneg %p131
        %p330 = pneg %p128
        %p331 = pneg %p152
        %p332 = pneg %p149
        %p333 = pneg %p173
        %p334 = pneg %p170
        %p335 = pneg %p199
        %p336 = pneg %p196
        %s337 = sand.u32 %s186, 1
        %s338 = scalar_lea.sflag [#allocation4], %s337
        %s339 = sand.u32 %s186, 1
        %s340 = smul.addr %s339, 16
        %s341 = scalar_lea.vmem [#allocation10], %s340
        %s342 = smul.u32 4, %s26
        %s343 = smul.u32 4, %s26
        %v345 = vld [vmem:[%s299] sm:$0xff]
        %v346 = vld [vmem:[%s299 + $0x8] sm:$0xff]
        %v347 = vld [vmem:[%s299 + $0x10] sm:$0xff]
        %v348 = vld [vmem:[%s299 + $0x18] sm:$0xff]
        %v349 = vld [vmem:[%s299 + $0x20] sm:$0xff]
        %v350 = vld [vmem:[%s299 + $0x28] sm:$0xff]
        %v351 = vld [vmem:[%s299 + $0x30] sm:$0xff]
        %v352 = vld [vmem:[%s299 + $0x38] sm:$0xff]
        %v353 = vld [vmem:[%s299 + $0x40] sm:$0xff]
        %v354 = vld [vmem:[%s299 + $0x48] sm:$0xff]
        %v355 = vld [vmem:[%s299 + $0x50] sm:$0xff]
        %v356 = vld [vmem:[%s299 + $0x58] sm:$0xff]
        %v357 = vld [vmem:[%s299 + $0x60] sm:$0xff]
        %v358 = vld [vmem:[%s299 + $0x68] sm:$0xff]
        %v359 = vld [vmem:[%s299 + $0x70] sm:$0xff]
        %v360 = vld [vmem:[%s299 + $0x78] sm:$0xff]
        %v361 = vld [vmem:[%s299 + $0x80] sm:$0xff]
        %v362 = vld [vmem:[%s299 + $0x88] sm:$0xff]
        %v363 = vld [vmem:[%s299 + $0x90] sm:$0xff]
        %v364 = vld [vmem:[%s299 + $0x98] sm:$0xff]
        %v365 = vld [vmem:[%s299 + $0xa0] sm:$0xff]
        %v366 = vld [vmem:[%s299 + $0xa8] sm:$0xff]
        %v367 = vld [vmem:[%s299 + $0xb0] sm:$0xff]
        %v368 = vld [vmem:[%s299 + $0xb8] sm:$0xff]
        %v369 = vld [vmem:[%s299 + $0xc0] sm:$0xff]
        %v370 = vld [vmem:[%s299 + $0xc8] sm:$0xff]
        %v371 = vld [vmem:[%s299 + $0xd0] sm:$0xff]
        %v372 = vld [vmem:[%s299 + $0xd8] sm:$0xff]
        %v373 = vpack.c.bf16 %v352, %v345
        %v374 = vpack.c.bf16 %v353, %v346
        %v375 = vpack.c.bf16 %v354, %v347
        %v376 = vpack.c.bf16 %v355, %v348
        %v377 = vpack.c.bf16 %v356, %v349
        %v378 = vpack.c.bf16 %v357, %v350
        %v379 = vpack.c.bf16 %v358, %v351
        %v380 = vpack.c.bf16 %v366, %v359
        %v381 = vpack.c.bf16 %v367, %v360
        %v382 = vpack.c.bf16 %v368, %v361
        %v383 = vpack.c.bf16 %v369, %v362
        %v384 = vpack.c.bf16 %v370, %v363
        %v385 = vpack.c.bf16 %v371, %v364
        %v386 = vpack.c.bf16 %v372, %v365
        %v387 = vld [vmem:[#allocation5] sm:$0xf]
        %v388 = vld [vmem:[#allocation5 + $0x4] sm:$0xf]
        %v389 = vld [vmem:[#allocation5 + $0x8] sm:$0xf]
        %v390 = vld [vmem:[#allocation5 + $0xc] sm:$0xf]
        %v391 = vld [vmem:[#allocation5 + $0x10] sm:$0xf]
        %v392 = vld [vmem:[#allocation5 + $0x14] sm:$0xf]
        %v393 = vld [vmem:[#allocation5 + $0x18] sm:$0xf]
        %v394 = vld [vmem:[#allocation5 + $0x1c] sm:$0xf]
        %v395 = vld [vmem:[#allocation5 + $0x20] sm:$0xf]
        %v396 = vld [vmem:[#allocation5 + $0x24] sm:$0xf]
        %v397 = vld [vmem:[#allocation5 + $0x28] sm:$0xf]
        %v398 = vld [vmem:[#allocation5 + $0x2c] sm:$0xf]
        %v399 = vld [vmem:[#allocation5 + $0x30] sm:$0xf]
        %v400 = vld [vmem:[#allocation5 + $0x34] sm:$0xf]
        %v401 = vld [vmem:[#allocation5 + $0x38] sm:$0xf]
        %v402 = vld [vmem:[#allocation5 + $0x3c] sm:$0xf]
        %v403 = vld [vmem:[#allocation5 + $0x40] sm:$0xf]
        %v404 = vld [vmem:[#allocation5 + $0x44] sm:$0xf]
        %v405 = vld [vmem:[#allocation5 + $0x48] sm:$0xf]
        %v406 = vld [vmem:[#allocation5 + $0x4c] sm:$0xf]
        %v407 = vld [vmem:[#allocation5 + $0x50] sm:$0xf]
        %v408 = vld [vmem:[#allocation5 + $0x54] sm:$0xf]
        %v409 = vld [vmem:[#allocation5 + $0x58] sm:$0xf]
        %v410 = vld [vmem:[#allocation5 + $0x5c] sm:$0xf]
        %v411 = vld [vmem:[#allocation5 + $0x60] sm:$0xf]
        %v412 = vld [vmem:[#allocation5 + $0x64] sm:$0xf]
        %v413 = vld [vmem:[#allocation5 + $0x68] sm:$0xf]
        %v414 = vld [vmem:[#allocation5 + $0x6c] sm:$0xf]
        %v415 = vld [vmem:[#allocation5 + $0x70] sm:$0xf]
        %v416 = vld [vmem:[#allocation5 + $0x74] sm:$0xf]
        %v417 = vld [vmem:[#allocation5 + $0x78] sm:$0xf]
        %v418 = vld [vmem:[#allocation5 + $0x7c] sm:$0xf]
        %v419 = vld [vmem:[#allocation5 + $0x80] sm:$0xf]
        %v420 = vld [vmem:[#allocation5 + $0x84] sm:$0xf]
        %v421 = vld [vmem:[#allocation5 + $0x88] sm:$0xf]
        %v422 = vld [vmem:[#allocation5 + $0x8c] sm:$0xf]
        %v423 = vld [vmem:[#allocation5 + $0x90] sm:$0xf]
        %v424 = vld [vmem:[#allocation5 + $0x94] sm:$0xf]
        %v425 = vld [vmem:[#allocation5 + $0x98] sm:$0xf]
        %v426 = vld [vmem:[#allocation5 + $0x9c] sm:$0xf]
        %v427 = vld [vmem:[#allocation5 + $0xa0] sm:$0xf]
        %v428 = vld [vmem:[#allocation5 + $0xa4] sm:$0xf]
        %v429 = vld [vmem:[#allocation5 + $0xa8] sm:$0xf]
        %v430 = vld [vmem:[#allocation5 + $0xac] sm:$0xf]
        %v431 = vld [vmem:[#allocation5 + $0xb0] sm:$0xf]
        %v432 = vld [vmem:[#allocation5 + $0xb4] sm:$0xf]
        %v433 = vld [vmem:[#allocation5 + $0xb8] sm:$0xf]
        %v434 = vld [vmem:[#allocation5 + $0xbc] sm:$0xf]
        %v435 = vld [vmem:[#allocation5 + $0xc0] sm:$0xf]
        %v436 = vld [vmem:[#allocation5 + $0xc4] sm:$0xf]
        %v437 = vld [vmem:[#allocation5 + $0xc8] sm:$0xf]
        %v438 = vld [vmem:[#allocation5 + $0xcc] sm:$0xf]
        %v439 = vld [vmem:[#allocation5 + $0xd0] sm:$0xf]
        %v440 = vld [vmem:[#allocation5 + $0xd4] sm:$0xf]
        %v441 = vld [vmem:[#allocation5 + $0xd8] sm:$0xf]
        %v442 = vld [vmem:[#allocation5 + $0xdc] sm:$0xf]
        %v443 = vld [vmem:[#allocation5 + $0xe0] sm:$0xf]
        %v444 = vld [vmem:[#allocation5 + $0xe4] sm:$0xf]
        %v445 = vld [vmem:[#allocation5 + $0xe8] sm:$0xf]
        %v446 = vld [vmem:[#allocation5 + $0xec] sm:$0xf]
        %v447 = vld [vmem:[#allocation5 + $0xf0] sm:$0xf]
        %v448 = vld [vmem:[#allocation5 + $0xf4] sm:$0xf]
        %v449 = vld [vmem:[#allocation5 + $0xf8] sm:$0xf]
        %v450 = vld [vmem:[#allocation5 + $0xfc] sm:$0xf]
        %v451 = vld [vmem:[#allocation5 + $0x100] sm:$0xf]
        %v452 = vld [vmem:[#allocation5 + $0x104] sm:$0xf]
        %v453 = vld [vmem:[#allocation5 + $0x108] sm:$0xf]
        %v454 = vld [vmem:[#allocation5 + $0x10c] sm:$0xf]
        %v455 = vld [vmem:[#allocation5 + $0x110] sm:$0xf]
        %v456 = vld [vmem:[#allocation5 + $0x114] sm:$0xf]
        %v457 = vld [vmem:[#allocation5 + $0x118] sm:$0xf]
        %v458 = vld [vmem:[#allocation5 + $0x11c] sm:$0xf]
        %v459 = vld [vmem:[#allocation5 + $0x120] sm:$0xf]
        %v460 = vld [vmem:[#allocation5 + $0x124] sm:$0xf]
        %v461 = vld [vmem:[#allocation5 + $0x128] sm:$0xf]
        %v462 = vld [vmem:[#allocation5 + $0x12c] sm:$0xf]
        %v463 = vld [vmem:[#allocation5 + $0x130] sm:$0xf]
        %v464 = vld [vmem:[#allocation5 + $0x134] sm:$0xf]
        %v465 = vld [vmem:[#allocation5 + $0x138] sm:$0xf]
        %v466 = vld [vmem:[#allocation5 + $0x13c] sm:$0xf]
        %v467 = vld [vmem:[#allocation5 + $0x140] sm:$0xf]
        %v468 = vld [vmem:[#allocation5 + $0x144] sm:$0xf]
        %v469 = vld [vmem:[#allocation5 + $0x148] sm:$0xf]
        %v470 = vld [vmem:[#allocation5 + $0x14c] sm:$0xf]
        %v471 = vld [vmem:[#allocation5 + $0x150] sm:$0xf]
        %v472 = vld [vmem:[#allocation5 + $0x154] sm:$0xf]
        %v473 = vld [vmem:[#allocation5 + $0x158] sm:$0xf]
        %v474 = vld [vmem:[#allocation5 + $0x15c] sm:$0xf]
        %v475 = vld [vmem:[#allocation5 + $0x160] sm:$0xf]
        %v476 = vld [vmem:[#allocation5 + $0x164] sm:$0xf]
        %v477 = vld [vmem:[#allocation5 + $0x168] sm:$0xf]
        %v478 = vld [vmem:[#allocation5 + $0x16c] sm:$0xf]
        %v479 = vld [vmem:[#allocation5 + $0x170] sm:$0xf]
        %v480 = vld [vmem:[#allocation5 + $0x174] sm:$0xf]
        %v481 = vld [vmem:[#allocation5 + $0x178] sm:$0xf]
        %v482 = vld [vmem:[#allocation5 + $0x17c] sm:$0xf]
        %v483 = vld [vmem:[#allocation5 + $0x180] sm:$0xf]
        %v484 = vld [vmem:[#allocation5 + $0x184] sm:$0xf]
        %v485 = vld [vmem:[%s2] sm:$0x1]
        %v487 = vlaneseq
        %v488 = vshrl.u32 %v487, 7
        %v489 = vsub.s32 0, %v488
        %v490 = vrot.slane %v485, %v489
        %v590 = vunpack.c.l.b16 %v387
        %v591 = vunpack.c.l.b16 %v388
        %v592 = vunpack.c.l.b16 %v389
        %v593 = vunpack.c.l.b16 %v390
        %v594 = vunpack.c.l.b16 %v391
        %v595 = vunpack.c.l.b16 %v392
        %v596 = vunpack.c.l.b16 %v393
        %v597 = vunpack.c.l.b16 %v394
        %v598 = vunpack.c.l.b16 %v395
        %v599 = vunpack.c.l.b16 %v396
        %v600 = vunpack.c.l.b16 %v397
        %v601 = vunpack.c.l.b16 %v398
        %v602 = vunpack.c.l.b16 %v399
        %v603 = vunpack.c.l.b16 %v400
        %v604 = vunpack.c.l.b16 %v401
        %v605 = vunpack.c.l.b16 %v402
        %v606 = vunpack.c.l.b16 %v403
        %v607 = vunpack.c.l.b16 %v404
        %v608 = vunpack.c.l.b16 %v405
        %v609 = vunpack.c.l.b16 %v406
        %v610 = vunpack.c.l.b16 %v407
        %v611 = vunpack.c.l.b16 %v408
        %v612 = vunpack.c.l.b16 %v409
        %v613 = vunpack.c.l.b16 %v410
        %v614 = vunpack.c.l.b16 %v411
        %v615 = vunpack.c.l.b16 %v412
        %v616 = vunpack.c.l.b16 %v413
        %v617 = vunpack.c.l.b16 %v414
        %v618 = vunpack.c.l.b16 %v415
        %v619 = vunpack.c.l.b16 %v416
        %v620 = vunpack.c.l.b16 %v417
        %v621 = vunpack.c.l.b16 %v418
        %v622 = vunpack.c.l.b16 %v419
        %v623 = vunpack.c.l.b16 %v420
        %v624 = vunpack.c.l.b16 %v421
        %v625 = vunpack.c.l.b16 %v422
        %v626 = vunpack.c.l.b16 %v423
        %v627 = vunpack.c.l.b16 %v424
        %v628 = vunpack.c.l.b16 %v425
        %v629 = vunpack.c.l.b16 %v426
        %v630 = vunpack.c.l.b16 %v427
        %v631 = vunpack.c.l.b16 %v428
        %v632 = vunpack.c.l.b16 %v429
        %v633 = vunpack.c.l.b16 %v430
        %v634 = vunpack.c.l.b16 %v431
        %v635 = vunpack.c.l.b16 %v432
        %v636 = vunpack.c.l.b16 %v433
        %v637 = vunpack.c.l.b16 %v434
        %v638 = vunpack.c.l.b16 %v435
        %v639 = vunpack.c.l.b16 %v436
        %v640 = vunpack.c.l.b16 %v437
        %v641 = vunpack.c.l.b16 %v438
        %v642 = vunpack.c.l.b16 %v439
        %v643 = vunpack.c.l.b16 %v440
        %v644 = vunpack.c.l.b16 %v441
        %v645 = vunpack.c.l.b16 %v442
        %v646 = vunpack.c.l.b16 %v443
        %v647 = vunpack.c.l.b16 %v444
        %v648 = vunpack.c.l.b16 %v445
        %v649 = vunpack.c.l.b16 %v446
        %v650 = vunpack.c.l.b16 %v447
        %v651 = vunpack.c.l.b16 %v448
        %v652 = vunpack.c.l.b16 %v449
        %v653 = vunpack.c.l.b16 %v450
        %v654 = vunpack.c.l.b16 %v451
        %v655 = vunpack.c.l.b16 %v452
        %v656 = vunpack.c.l.b16 %v453
        %v657 = vunpack.c.l.b16 %v454
        %v658 = vunpack.c.l.b16 %v455
        %v659 = vunpack.c.l.b16 %v456
        %v660 = vunpack.c.l.b16 %v457
        %v661 = vunpack.c.l.b16 %v458
        %v662 = vunpack.c.l.b16 %v459
        %v663 = vunpack.c.l.b16 %v460
        %v664 = vunpack.c.l.b16 %v461
        %v665 = vunpack.c.l.b16 %v462
        %v666 = vunpack.c.l.b16 %v463
        %v667 = vunpack.c.l.b16 %v464
        %v668 = vunpack.c.l.b16 %v465
        %v669 = vunpack.c.l.b16 %v466
        %v670 = vunpack.c.l.b16 %v467
        %v671 = vunpack.c.l.b16 %v468
        %v672 = vunpack.c.l.b16 %v469
        %v673 = vunpack.c.l.b16 %v470
        %v674 = vunpack.c.l.b16 %v471
        %v675 = vunpack.c.l.b16 %v472
        %v676 = vunpack.c.l.b16 %v473
        %v677 = vunpack.c.l.b16 %v474
        %v678 = vunpack.c.l.b16 %v475
        %v679 = vunpack.c.l.b16 %v476
        %v680 = vunpack.c.l.b16 %v477
        %v681 = vunpack.c.l.b16 %v478
        %v682 = vunpack.c.l.b16 %v479
        %v683 = vunpack.c.l.b16 %v480
        %v684 = vunpack.c.l.b16 %v481
        %v685 = vunpack.c.l.b16 %v482
        %v686 = vunpack.c.l.b16 %v483
        %v687 = vunpack.c.l.b16 %v484
        %v688 = vpack.c.b16 %v591, %v590
        %v689 = vpack.c.b16 %v593, %v592
        %v690 = vpack.c.b16 %v595, %v594
        %v691 = vpack.c.b16 %v597, %v596
        %v692 = vpack.c.b16 %v599, %v598
        %v693 = vpack.c.b16 %v601, %v600
        %v694 = vpack.c.b16 %v603, %v602
        %v695 = vpack.c.b16 %v605, %v604
        %v696 = vpack.c.b16 %v607, %v606
        %v697 = vpack.c.b16 %v609, %v608
        %v698 = vpack.c.b16 %v611, %v610
        %v699 = vpack.c.b16 %v613, %v612
        %v700 = vpack.c.b16 %v615, %v614
        %v701 = vpack.c.b16 %v617, %v616
        %v702 = vpack.c.b16 %v619, %v618
        %v703 = vpack.c.b16 %v621, %v620
        %v704 = vpack.c.b16 %v623, %v622
        %v705 = vpack.c.b16 %v625, %v624
        %v706 = vpack.c.b16 %v627, %v626
        %v707 = vpack.c.b16 %v629, %v628
        %v708 = vpack.c.b16 %v631, %v630
        %v709 = vpack.c.b16 %v633, %v632
        %v710 = vpack.c.b16 %v635, %v634
        %v711 = vpack.c.b16 %v637, %v636
        %v712 = vpack.c.b16 %v639, %v638
        %v713 = vpack.c.b16 %v641, %v640
        %v714 = vpack.c.b16 %v643, %v642
        %v715 = vpack.c.b16 %v645, %v644
        %v716 = vpack.c.b16 %v647, %v646
        %v717 = vpack.c.b16 %v649, %v648
        %v718 = vpack.c.b16 %v651, %v650
        %v719 = vpack.c.b16 %v653, %v652
        %v720 = vpack.c.b16 %v655, %v654
        %v721 = vpack.c.b16 %v657, %v656
        %v722 = vpack.c.b16 %v659, %v658
        %v723 = vpack.c.b16 %v661, %v660
        %v724 = vpack.c.b16 %v663, %v662
        %v725 = vpack.c.b16 %v665, %v664
        %v726 = vpack.c.b16 %v667, %v666
        %v727 = vpack.c.b16 %v669, %v668
        %v728 = vpack.c.b16 %v671, %v670
        %v729 = vpack.c.b16 %v673, %v672
        %v730 = vpack.c.b16 %v675, %v674
        %v731 = vpack.c.b16 %v677, %v676
        %v732 = vpack.c.b16 %v679, %v678
        %v733 = vpack.c.b16 %v681, %v680
        %v734 = vpack.c.b16 %v683, %v682
        %v735 = vpack.c.b16 %v685, %v684
        %v736 = vpack.c.b16 %v687, %v686
        %vm786 = vcmask 130048
        %v788 = vsel %vm786, %v379, 0
        %v791 = vsel %vm786, %v386, 0
        %793 = vmatprep.subr.bf16.mxu0 0
        %794 = vmatpush1.bf16.msra.mxu0 %v688
        %795 = vmatprep.subr.bf16.mxu0 0
        %796 = vmatpush1.bf16.msra.mxu0 %v689
        %797 = vmatprep.subr.bf16.mxu0 0
        %798 = vmatpush1.bf16.msra.mxu0 %v690
        %799 = vmatprep.subr.bf16.mxu0 0
        %800 = vmatpush1.bf16.msra.mxu0 %v691
        %801 = vmatprep.subr.bf16.mxu0 0
        %802 = vmatpush1.bf16.msra.mxu0 %v692
        %803 = vmatprep.subr.bf16.mxu0 0
        %804 = vmatpush1.bf16.msra.mxu0 %v693
        %805 = vmatprep.subr.bf16.mxu0 0
        %806 = vmatpush1.bf16.msra.mxu0 %v694
        %807 = vmatprep.subr.bf16.mxu0 0
        %808 = vmatpush1.bf16.msra.mxu0 %v695
        %809 = vmatprep.subr.bf16.mxu0 0
        %810 = vmatpush1.bf16.msra.mxu0 %v696
        %811 = vmatprep.subr.bf16.mxu0 0
        %812 = vmatpush1.bf16.msra.mxu0 %v697
        %813 = vmatprep.subr.bf16.mxu0 0
        %814 = vmatpush1.bf16.msra.mxu0 %v698
        %815 = vmatprep.subr.bf16.mxu0 0
        %816 = vmatpush1.bf16.msra.mxu0 %v699
        %817 = vmatprep.subr.bf16.mxu0 0
        %818 = vmatpush1.bf16.msra.mxu0 %v700
        %819 = vmatprep.subr.bf16.mxu0 0
        %820 = vmatpush1.bf16.msra.mxu0 %v701
        %821 = vmatprep.subr.bf16.mxu0 0
        %822 = vmatpush1.bf16.msra.mxu0 %v702
        %823 = vmatprep.subr.bf16.mxu0 0
        %824 = vmatpush1.bf16.msra.mxu0 %v703
        %825 = vmatprep.mubr.bf16.mxu0 %v374
        %826 = vmatmul.mubr.bf16.gmra.mrb[0].mxu0 %v373
        %v827 = vpop.f32.mrb[0].mxu0
        %v828 = vadd.f32 %v490, %v827
        %v829 = vpop.f32.mrb[0].mxu0
        %v830 = vpop.f32.mrb[0].mxu0
        %v831 = vadd.f32 %v490, %v830
        %v832 = vpop.f32.mrb[0].mxu0
        %833 = vmatprep.mubr.bf16.mxu0 %v381
        %834 = vmatmul.mubr.bf16.gmra.mrb[0].mxu0 %v380
        %v835 = vpop.f32.mrb[0].mxu0
        %v836 = vadd.f32 %v490, %v835
        %v837 = vpop.f32.mrb[0].mxu0
        %v838 = vpop.f32.mrb[0].mxu0
        %v839 = vadd.f32 %v490, %v838
        %v840 = vpop.f32.mrb[0].mxu0
        %841 = vdwg.mxu0
        %842 = vmatprep.subr.bf16.mxu0 0
        %843 = vmatpush1.bf16.msra.mxu0 %v704
        %844 = vmatprep.subr.bf16.mxu0 0
        %845 = vmatpush1.bf16.msra.mxu0 %v705
        %846 = vmatprep.subr.bf16.mxu0 0
        %847 = vmatpush1.bf16.msra.mxu0 %v706
        %848 = vmatprep.subr.bf16.mxu0 0
        %849 = vmatpush1.bf16.msra.mxu0 %v707
        %850 = vmatprep.subr.bf16.mxu0 0
        %851 = vmatpush1.bf16.msra.mxu0 %v708
        %852 = vmatprep.subr.bf16.mxu0 0
        %853 = vmatpush1.bf16.msra.mxu0 %v709
        %854 = vmatprep.subr.bf16.mxu0 0
        %855 = vmatpush1.bf16.msra.mxu0 %v710
        %856 = vmatprep.subr.bf16.mxu0 0
        %857 = vmatpush1.bf16.msra.mxu0 %v711
        %858 = vmatprep.subr.bf16.mxu0 0
        %859 = vmatpush1.bf16.msra.mxu0 %v712
        %860 = vmatprep.subr.bf16.mxu0 0
        %861 = vmatpush1.bf16.msra.mxu0 %v713
        %862 = vmatprep.subr.bf16.mxu0 0
        %863 = vmatpush1.bf16.msra.mxu0 %v714
        %864 = vmatprep.subr.bf16.mxu0 0
        %865 = vmatpush1.bf16.msra.mxu0 %v715
        %866 = vmatprep.subr.bf16.mxu0 0
        %867 = vmatpush1.bf16.msra.mxu0 %v716
        %868 = vmatprep.subr.bf16.mxu0 0
        %869 = vmatpush1.bf16.msra.mxu0 %v717
        %870 = vmatprep.subr.bf16.mxu0 0
        %871 = vmatpush1.bf16.msra.mxu0 %v718
        %872 = vmatprep.subr.bf16.mxu0 0
        %873 = vmatpush1.bf16.msra.mxu0 %v719
        %874 = vmatprep.mubr.bf16.mxu0 %v376
        %875 = vmatmul.mubr.bf16.gmra.mrb[0].mxu0 %v375
        %v876 = vpop.f32.mrb[0].mxu0
        %v877 = vadd.f32 %v828, %v876
        %v878 = vpop.f32.mrb[0].mxu0
        %v879 = vpop.f32.mrb[0].mxu0
        %v880 = vadd.f32 %v831, %v879
        %v881 = vpop.f32.mrb[0].mxu0
        %882 = vmatprep.mubr.bf16.mxu0 %v383
        %883 = vmatmul.mubr.bf16.gmra.mrb[0].mxu0 %v382
        %v884 = vpop.f32.mrb[0].mxu0
        %v885 = vadd.f32 %v836, %v884
        %v886 = vpop.f32.mrb[0].mxu0
        %v887 = vpop.f32.mrb[0].mxu0
        %v888 = vadd.f32 %v839, %v887
        %v889 = vpop.f32.mrb[0].mxu0
        %890 = vdwg.mxu0
        %891 = vmatprep.subr.bf16.mxu0 0
        %892 = vmatpush1.bf16.msra.mxu0 %v720
        %893 = vmatprep.subr.bf16.mxu0 0
        %894 = vmatpush1.bf16.msra.mxu0 %v721
        %895 = vmatprep.subr.bf16.mxu0 0
        %896 = vmatpush1.bf16.msra.mxu0 %v722
        %897 = vmatprep.subr.bf16.mxu0 0
        %898 = vmatpush1.bf16.msra.mxu0 %v723
        %899 = vmatprep.subr.bf16.mxu0 0
        %900 = vmatpush1.bf16.msra.mxu0 %v724
        %901 = vmatprep.subr.bf16.mxu0 0
        %902 = vmatpush1.bf16.msra.mxu0 %v725
        %903 = vmatprep.subr.bf16.mxu0 0
        %904 = vmatpush1.bf16.msra.mxu0 %v726
        %905 = vmatprep.subr.bf16.mxu0 0
        %906 = vmatpush1.bf16.msra.mxu0 %v727
        %907 = vmatprep.subr.bf16.mxu0 0
        %908 = vmatpush1.bf16.msra.mxu0 %v728
        %909 = vmatprep.subr.bf16.mxu0 0
        %910 = vmatpush1.bf16.msra.mxu0 %v729
        %911 = vmatprep.subr.bf16.mxu0 0
        %912 = vmatpush1.bf16.msra.mxu0 %v730
        %913 = vmatprep.subr.bf16.mxu0 0
        %914 = vmatpush1.bf16.msra.mxu0 %v731
        %915 = vmatprep.subr.bf16.mxu0 0
        %916 = vmatpush1.bf16.msra.mxu0 %v732
        %917 = vmatprep.subr.bf16.mxu0 0
        %918 = vmatpush1.bf16.msra.mxu0 %v733
        %919 = vmatprep.subr.bf16.mxu0 0
        %920 = vmatpush1.bf16.msra.mxu0 %v734
        %921 = vmatprep.subr.bf16.mxu0 0
        %922 = vmatpush1.bf16.msra.mxu0 %v735
        %923 = vmatprep.mubr.bf16.mxu0 %v378
        %924 = vmatmul.mubr.bf16.gmra.mrb[0].mxu0 %v377
        %v925 = vpop.f32.mrb[0].mxu0
        %v926 = vadd.f32 %v877, %v925
        %v927 = vpop.f32.mrb[0].mxu0
        %v928 = vpop.f32.mrb[0].mxu0
        %v929 = vadd.f32 %v880, %v928
        %v930 = vpop.f32.mrb[0].mxu0
        %931 = vmatprep.mubr.bf16.mxu0 %v385
        %932 = vmatmul.mubr.bf16.gmra.mrb[0].mxu0 %v384
        %v933 = vpop.f32.mrb[0].mxu0
        %v934 = vadd.f32 %v885, %v933
        %v935 = vpop.f32.mrb[0].mxu0
        %v936 = vpop.f32.mrb[0].mxu0
        %v937 = vadd.f32 %v888, %v936
        %v938 = vpop.f32.mrb[0].mxu0
        %939 = vdwg.mxu0
        %940 = vmatprep.subr.bf16.mxu0 0
        %941 = vmatpush1.bf16.msra.mxu0 %v736
        %942 = vmatprep.subr.bf16.mxu0 0
        %943 = vmatpush1.bf16.msra.mxu0 0
        %944 = vmatprep.subr.bf16.mxu0 0
        %945 = vmatpush1.bf16.msra.mxu0 0
        %946 = vmatprep.subr.bf16.mxu0 0
        %947 = vmatpush1.bf16.msra.mxu0 0
        %948 = vmatprep.subr.bf16.mxu0 0
        %949 = vmatpush1.bf16.msra.mxu0 0
        %950 = vmatprep.subr.bf16.mxu0 0
        %951 = vmatpush1.bf16.msra.mxu0 0
        %952 = vmatprep.subr.bf16.mxu0 0
        %953 = vmatpush1.bf16.msra.mxu0 0
        %954 = vmatprep.subr.bf16.mxu0 0
        %955 = vmatpush1.bf16.msra.mxu0 0
        %956 = vmatprep.subr.bf16.mxu0 0
        %957 = vmatpush1.bf16.msra.mxu0 0
        %958 = vmatprep.subr.bf16.mxu0 0
        %959 = vmatpush1.bf16.msra.mxu0 0
        %960 = vmatprep.subr.bf16.mxu0 0
        %961 = vmatpush1.bf16.msra.mxu0 0
        %962 = vmatprep.subr.bf16.mxu0 0
        %963 = vmatpush1.bf16.msra.mxu0 0
        %964 = vmatprep.subr.bf16.mxu0 0
        %965 = vmatpush1.bf16.msra.mxu0 0
        %966 = vmatprep.subr.bf16.mxu0 0
        %967 = vmatpush1.bf16.msra.mxu0 0
        %968 = vmatprep.subr.bf16.mxu0 0
        %969 = vmatpush1.bf16.msra.mxu0 0
        %970 = vmatprep.subr.bf16.mxu0 0
        %971 = vmatpush1.bf16.msra.mxu0 0
        %972 = vmatprep.mubr.bf16.mxu0 0
        %973 = vmatmul.mubr.bf16.gmra.mrb[0].mxu0 %v788
        %v974 = vpop.f32.mrb[0].mxu0
        %v975 = vadd.f32 %v926, %v974
        %v976 = vpop.f32.mrb[0].mxu0
        %v977 = vpop.f32.mrb[0].mxu0
        %v978 = vadd.f32 %v929, %v977
        %v979 = vpop.f32.mrb[0].mxu0
        %980 = vmatprep.mubr.bf16.mxu0 0
        %981 = vmatmul.mubr.bf16.gmra.mrb[0].mxu0 %v791
        %v982 = vpop.f32.mrb[0].mxu0
        %v983 = vadd.f32 %v934, %v982
        %v984 = vpop.f32.mrb[0].mxu0
        %v985 = vpop.f32.mrb[0].mxu0
        %v986 = vadd.f32 %v937, %v985
        %v987 = vpop.f32.mrb[0].mxu0
        %988 = vdwg.mxu0
        %v989 = vmax.f32 %v975, 0.0
        %v990 = vmax.f32 %v978, 0.0
        %v991 = vmax.f32 %v983, 0.0
        %v992 = vmax.f32 %v986, 0.0
        %v993 = vpack.c.bf16 %v990, %v989
        %v994 = vpack.c.bf16 %v992, %v991
        %v995 = vld [vmem:[#allocation7] sm:$0xf]
        %v996 = vld [vmem:[#allocation7 + $0x4] sm:$0xf]
        %v997 = vld [vmem:[#allocation7 + $0x8] sm:$0xf]
        %v998 = vld [vmem:[#allocation7 + $0xc] sm:$0xf]
        %v999 = vld [vmem:[#allocation7 + $0x10] sm:$0xf]
        %v1000 = vld [vmem:[#allocation7 + $0x14] sm:$0xf]
        %v1001 = vld [vmem:[#allocation7 + $0x18] sm:$0xf]
        %v1002 = vld [vmem:[#allocation7 + $0x1c] sm:$0xf]
        %v1003 = vld [vmem:[#allocation7 + $0x20] sm:$0xf]
        %v1004 = vld [vmem:[#allocation7 + $0x24] sm:$0xf]
        %v1005 = vld [vmem:[#allocation7 + $0x28] sm:$0xf]
        %v1006 = vld [vmem:[#allocation7 + $0x2c] sm:$0xf]
        %v1007 = vld [vmem:[#allocation7 + $0x30] sm:$0xf]
        %v1008 = vld [vmem:[#allocation7 + $0x34] sm:$0xf]
        %v1009 = vld [vmem:[#allocation7 + $0x38] sm:$0xf]
        %v1010 = vld [vmem:[#allocation7 + $0x3c] sm:$0xf]
        %v1011 = vld [vmem:[%s4] sm:$0x1]
        %v1013 = vlaneseq
        %v1014 = vshrl.u32 %v1013, 7
        %v1015 = vsub.s32 0, %v1014
        %v1016 = vrot.slane %v1011, %v1015
        %v1034 = vunpack.c.l.b16 %v995
        %v1035 = vunpack.c.l.b16 %v996
        %v1036 = vunpack.c.l.b16 %v997
        %v1037 = vunpack.c.l.b16 %v998
        %v1038 = vunpack.c.l.b16 %v999
        %v1039 = vunpack.c.l.b16 %v1000
        %v1040 = vunpack.c.l.b16 %v1001
        %v1041 = vunpack.c.l.b16 %v1002
        %v1042 = vunpack.c.l.b16 %v1003
        %v1043 = vunpack.c.l.b16 %v1004
        %v1044 = vunpack.c.l.b16 %v1005
        %v1045 = vunpack.c.l.b16 %v1006
        %v1046 = vunpack.c.l.b16 %v1007
        %v1047 = vunpack.c.l.b16 %v1008
        %v1048 = vunpack.c.l.b16 %v1009
        %v1049 = vunpack.c.l.b16 %v1010
        %v1050 = vpack.c.b16 %v1035, %v1034
        %v1051 = vpack.c.b16 %v1037, %v1036
        %v1052 = vpack.c.b16 %v1039, %v1038
        %v1053 = vpack.c.b16 %v1041, %v1040
        %v1054 = vpack.c.b16 %v1043, %v1042
        %v1055 = vpack.c.b16 %v1045, %v1044
        %v1056 = vpack.c.b16 %v1047, %v1046
        %v1057 = vpack.c.b16 %v1049, %v1048
        %1066 = vmatprep.subr.bf16.mxu0 0
        %1067 = vmatpush1.bf16.msra.mxu0 %v1050
        %1068 = vmatprep.subr.bf16.mxu0 0
        %1069 = vmatpush1.bf16.msra.mxu0 %v1051
        %1070 = vmatprep.subr.bf16.mxu0 0
        %1071 = vmatpush1.bf16.msra.mxu0 %v1052
        %1072 = vmatprep.subr.bf16.mxu0 0
        %1073 = vmatpush1.bf16.msra.mxu0 %v1053
        %1074 = vmatprep.subr.bf16.mxu0 0
        %1075 = vmatpush1.bf16.msra.mxu0 %v1054
        %1076 = vmatprep.subr.bf16.mxu0 0
        %1077 = vmatpush1.bf16.msra.mxu0 %v1055
        %1078 = vmatprep.subr.bf16.mxu0 0
        %1079 = vmatpush1.bf16.msra.mxu0 %v1056
        %1080 = vmatprep.subr.bf16.mxu0 0
        %1081 = vmatpush1.bf16.msra.mxu0 %v1057
        %1082 = vmatprep.subr.bf16.mxu0 0
        %1083 = vmatpush1.bf16.msra.mxu0 0
        %1084 = vmatprep.subr.bf16.mxu0 0
        %1085 = vmatpush1.bf16.msra.mxu0 0
        %1086 = vmatprep.subr.bf16.mxu0 0
        %1087 = vmatpush1.bf16.msra.mxu0 0
        %1088 = vmatprep.subr.bf16.mxu0 0
        %1089 = vmatpush1.bf16.msra.mxu0 0
        %1090 = vmatprep.subr.bf16.mxu0 0
        %1091 = vmatpush1.bf16.msra.mxu0 0
        %1092 = vmatprep.subr.bf16.mxu0 0
        %1093 = vmatpush1.bf16.msra.mxu0 0
        %1094 = vmatprep.subr.bf16.mxu0 0
        %1095 = vmatpush1.bf16.msra.mxu0 0
        %1096 = vmatprep.subr.bf16.mxu0 0
        %1097 = vmatpush1.bf16.msra.mxu0 0
        %1098 = vmatprep.mubr.bf16.mxu0 0
        %1099 = vmatmul.mubr.bf16.gmra.mrb[0].mxu0 %v993
        %v1100 = vpop.f32.mrb[0].mxu0
        %v1101 = vadd.f32 %v1016, %v1100
        %v1102 = vpop.f32.mrb[0].mxu0
        %v1103 = vpop.f32.mrb[0].mxu0
        %v1104 = vadd.f32 %v1016, %v1103
        %v1105 = vpop.f32.mrb[0].mxu0
        %1106 = vmatprep.mubr.bf16.mxu0 0
        %1107 = vmatmul.mubr.bf16.gmra.mrb[0].mxu0 %v994
        %v1108 = vpop.f32.mrb[0].mxu0
        %v1109 = vadd.f32 %v1016, %v1108
        %v1110 = vpop.f32.mrb[0].mxu0
        %v1111 = vpop.f32.mrb[0].mxu0
        %v1112 = vadd.f32 %v1016, %v1111
        %v1113 = vpop.f32.mrb[0].mxu0
        %1114 = vdwg.mxu0
        %v1115 = vmax.f32 %v1101, 0.0
        %v1116 = vmax.f32 %v1104, 0.0
        %v1117 = vmax.f32 %v1109, 0.0
        %v1118 = vmax.f32 %v1112, 0.0
        %v1119 = vpack.c.bf16 %v1116, %v1115
        %v1120 = vpack.c.bf16 %v1118, %v1117
        %v1121 = vld [vmem:[#allocation8] sm:$0xf]
        %v1122 = vld [vmem:[#allocation8 + $0x4] sm:$0xf]
        %v1123 = vld [vmem:[#allocation8 + $0x8] sm:$0xf]
        %v1124 = vld [vmem:[#allocation8 + $0xc] sm:$0xf]
        %v1125 = vld [vmem:[#allocation8 + $0x10] sm:$0xf]
        %v1126 = vld [vmem:[#allocation8 + $0x14] sm:$0xf]
        %v1127 = vld [vmem:[#allocation8 + $0x18] sm:$0xf]
        %v1128 = vld [vmem:[#allocation8 + $0x1c] sm:$0xf]
        %v1129 = vld [vmem:[#allocation8 + $0x20] sm:$0xf]
        %v1130 = vld [vmem:[#allocation8 + $0x24] sm:$0xf]
        %v1131 = vld [vmem:[#allocation8 + $0x28] sm:$0xf]
        %v1132 = vld [vmem:[#allocation8 + $0x2c] sm:$0xf]
        %v1133 = vld [vmem:[#allocation8 + $0x30] sm:$0xf]
        %v1134 = vld [vmem:[#allocation8 + $0x34] sm:$0xf]
        %v1135 = vld [vmem:[#allocation8 + $0x38] sm:$0xf]
        %v1136 = vld [vmem:[#allocation8 + $0x3c] sm:$0xf]
        %v1137 = vld [vmem:[%s6] sm:$0x1]
        %v1139 = vlaneseq
        %v1140 = vshrl.u32 %v1139, 7
        %v1141 = vsub.s32 0, %v1140
        %v1142 = vrot.slane %v1137, %v1141
        %v1160 = vunpack.c.l.b16 %v1121
        %v1161 = vunpack.c.l.b16 %v1122
        %v1162 = vunpack.c.l.b16 %v1123
        %v1163 = vunpack.c.l.b16 %v1124
        %v1164 = vunpack.c.l.b16 %v1125
        %v1165 = vunpack.c.l.b16 %v1126
        %v1166 = vunpack.c.l.b16 %v1127
        %v1167 = vunpack.c.l.b16 %v1128
        %v1168 = vunpack.c.l.b16 %v1129
        %v1169 = vunpack.c.l.b16 %v1130
        %v1170 = vunpack.c.l.b16 %v1131
        %v1171 = vunpack.c.l.b16 %v1132
        %v1172 = vunpack.c.l.b16 %v1133
        %v1173 = vunpack.c.l.b16 %v1134
        %v1174 = vunpack.c.l.b16 %v1135
        %v1175 = vunpack.c.l.b16 %v1136
        %v1176 = vpack.c.b16 %v1161, %v1160
        %v1177 = vpack.c.b16 %v1163, %v1162
        %v1178 = vpack.c.b16 %v1165, %v1164
        %v1179 = vpack.c.b16 %v1167, %v1166
        %v1180 = vpack.c.b16 %v1169, %v1168
        %v1181 = vpack.c.b16 %v1171, %v1170
        %v1182 = vpack.c.b16 %v1173, %v1172
        %v1183 = vpack.c.b16 %v1175, %v1174
        %1192 = vmatprep.subr.bf16.mxu0 0
        %1193 = vmatpush1.bf16.msra.mxu0 %v1176
        %1194 = vmatprep.subr.bf16.mxu0 0
        %1195 = vmatpush1.bf16.msra.mxu0 %v1177
        %1196 = vmatprep.subr.bf16.mxu0 0
        %1197 = vmatpush1.bf16.msra.mxu0 %v1178
        %1198 = vmatprep.subr.bf16.mxu0 0
        %1199 = vmatpush1.bf16.msra.mxu0 %v1179
        %1200 = vmatprep.subr.bf16.mxu0 0
        %1201 = vmatpush1.bf16.msra.mxu0 %v1180
        %1202 = vmatprep.subr.bf16.mxu0 0
        %1203 = vmatpush1.bf16.msra.mxu0 %v1181
        %1204 = vmatprep.subr.bf16.mxu0 0
        %1205 = vmatpush1.bf16.msra.mxu0 %v1182
        %1206 = vmatprep.subr.bf16.mxu0 0
        %1207 = vmatpush1.bf16.msra.mxu0 %v1183
        %1208 = vmatprep.subr.bf16.mxu0 0
        %1209 = vmatpush1.bf16.msra.mxu0 0
        %1210 = vmatprep.subr.bf16.mxu0 0
        %1211 = vmatpush1.bf16.msra.mxu0 0
        %1212 = vmatprep.subr.bf16.mxu0 0
        %1213 = vmatpush1.bf16.msra.mxu0 0
        %1214 = vmatprep.subr.bf16.mxu0 0
        %1215 = vmatpush1.bf16.msra.mxu0 0
        %1216 = vmatprep.subr.bf16.mxu0 0
        %1217 = vmatpush1.bf16.msra.mxu0 0
        %1218 = vmatprep.subr.bf16.mxu0 0
        %1219 = vmatpush1.bf16.msra.mxu0 0
        %1220 = vmatprep.subr.bf16.mxu0 0
        %1221 = vmatpush1.bf16.msra.mxu0 0
        %1222 = vmatprep.subr.bf16.mxu0 0
        %1223 = vmatpush1.bf16.msra.mxu0 0
        %1224 = vmatprep.mubr.bf16.mxu0 0
        %1225 = vmatmul.mubr.bf16.gmra.mrb[0].mxu0 %v1119
        %v1226 = vpop.f32.mrb[0].mxu0
        %v1227 = vadd.f32 %v1142, %v1226
        %v1228 = vpop.f32.mrb[0].mxu0
        %v1229 = vpop.f32.mrb[0].mxu0
        %v1230 = vadd.f32 %v1142, %v1229
        %v1231 = vpop.f32.mrb[0].mxu0
        %1232 = vmatprep.mubr.bf16.mxu0 0
        %1233 = vmatmul.mubr.bf16.gmra.mrb[0].mxu0 %v1120
        %v1234 = vpop.f32.mrb[0].mxu0
        %v1235 = vadd.f32 %v1142, %v1234
        %v1236 = vpop.f32.mrb[0].mxu0
        %v1237 = vpop.f32.mrb[0].mxu0
        %v1238 = vadd.f32 %v1142, %v1237
        %v1239 = vpop.f32.mrb[0].mxu0
        %1240 = vdwg.mxu0
        %v1241 = vpack.c.bf16 %v1230, %v1227
        %v1242 = vpack.c.bf16 %v1238, %v1235
        %v1245 = vunpack.c.l.b16 %v1241
        %v1246 = vunpack.c.h.b16 %v1241
        %v1247 = vunpack.c.l.b16 %v1242
        %v1248 = vunpack.c.h.b16 %v1242
        %v1249 = vpack.c.b16 %v1245, %v1245
        %v1250 = vpack.c.b16 %v1246, %v1246
        %v1251 = vpack.c.b16 %v1247, %v1247
        %v1252 = vpack.c.b16 %v1248, %v1248
        %1257 = vst [vmem:[%s341] sm:$0xf] %v1249
        %1258 = vst [vmem:[%s341 + $0x4] sm:$0xf] %v1250
        %1259 = vst [vmem:[%s341 + $0x8] sm:$0xf] %v1251
        %1260 = vst [vmem:[%s341 + $0xc] sm:$0xf] %v1252
        %s1261 = sand.u32 %s186, 1
        %s1262 = scalar_lea.sflag [#allocation4], %s1261
        %s1263 = sand.u32 %s186, 1
        %s1264 = smul.addr %s1263, 16
        %s1265 = scalar_lea.vmem [#allocation10], %s1264
        // Predicated region
        $region65: #{tpu_custom_call.1} parent=47 // pred_check
          %p1266 = pneg %p196
        $region66: #{tpu_custom_call.1} parent=47 // pred_check_branch
          %1268 = sbr.rel (%p1266) target = $region68
        $region67: #{tpu_custom_call.1} parent=47 // pred_region
          %s1269 = smul.u32 4, %s26
          %s1271 = ssub.s32 256, 256
          %1272 = vsyncadd %s1262, %s1271
          %s1273 = smul.addr %s1269, 64
          %s1274 = scalar_lea.hbm %s7, %s1273
          %s1275 = sshll.u32 %s1265, 4
          %s1276 = int_to_ptr.vmem [resolvable:$true] %s1275
          %1281 = dma.vmem_to_hbm [thread:$0]  %s1276, 256, %s1274, %s1262, 64, 64, 4
        $region68: #{tpu_custom_call.1} parent=47 // pred_fallthru
          _
      $region48: #{tpu_custom_call.1} parent=5 // pred_fallthru
        _
      %p1282 = scmp.le.s32.totalorder 2, %s21
      // Predicated region
      $region69: #{tpu_custom_call.1} parent=5 // pred_check
        %p1283 = pneg %p1282
      $region70: #{tpu_custom_call.1} parent=5 // pred_check_branch
        %1285 = sbr.rel (%p1283) target = $region72
      $region71: #{tpu_custom_call.1} parent=5 // pred_region
        %s1286 = ssub.s32 %s21, 2
        // Predicated region
        $region73: #{tpu_custom_call.1} parent=71 // pred_check
          %p1287 = pneg %p202
        $region74: #{tpu_custom_call.1} parent=71 // pred_check_branch
          %1289 = sbr.rel (%p1287) target = $region76
        $region75: #{tpu_custom_call.1} parent=71 // pred_region
          %s1290 = sand.u32 %s187, 1
          %s1291 = scalar_lea.sflag [#allocation4], %s1290
          %s1292 = sand.u32 %s187, 1
          %s1293 = smul.addr %s1292, 16
          %s1294 = scalar_lea.vmem [#allocation10], %s1293
          %1295 = dma.done %s1291, 256
        $region76: #{tpu_custom_call.1} parent=71 // pred_fallthru
          _
      $region72: #{tpu_custom_call.1} parent=5 // pred_fallthru
        _
    $region6: #{tpu_custom_call.1} parent=1 // loop_footer
      %s25 = sadd.s32 1, %s21
    $region7: #{tpu_custom_call.1} parent=1 // loop_footer_branch
      %20 = sbr.rel target = $region3
    $region8: #{tpu_custom_call.1} parent=1 // loop_exit
      _
    %1296 = vsyncpa [#allocation3], 1
    %s1297 = scalar_lea.sflag [#allocation3], 1
    %1298 = vsyncpa %s1297, 1
    %1299 = vsyncpa [#allocation6], 1
    %1300 = vsyncpa [#allocation9], 1
    %1301 = vsyncpa [#allocation4], 1
    %s1302 = scalar_lea.sflag [#allocation4], 1
    %1303 = vsyncpa %s1302, 1

</llo_original>
